<compile_context>
chip_gen: v7x
topology: tpu7x:2x2x1
jax: 0.10.0
libtpu: 0.0.40
codegen_flags: <defaults>
</compile_context>

<pallas_src>
import functools

import jax
import jax.numpy as jnp
from jax.experimental import pallas as pl
from jax.experimental.pallas import tpu as pltpu


def _mlp_kernel(*refs, num_layers):
    """Fused forward pass: refs = (x, W0, b0, W1, b1, ..., Wn, bn, out)."""
    x_ref = refs[0]
    o_ref = refs[-1]
    wb_refs = refs[1:-1]

    h = x_ref[...]
    for layer in range(num_layers):
        w = wb_refs[2 * layer][...]        # (Din_l, Dout_l)
        b = wb_refs[2 * layer + 1][...]    # (1, Dout_l)
        y = jnp.dot(h, w, preferred_element_type=jnp.float32) + b
        if layer != num_layers - 1:
            y = jnp.maximum(y, 0.0)        # ReLU on hidden layers only
        h = y
    o_ref[...] = h.astype(o_ref.dtype)


def neural_network_forward(params, x, *, batch_tile=512):
    """Forward pass of the whole MLP as one fused Pallas kernel.

    params: list of (W, b) with W (in, out) f32 and b (1, out) f32.
    x: (B, input_dim) -> (B, output_dim) f32.
    """
    x = x.astype(jnp.float32)
    B, Din = x.shape
    Dout = params[-1][0].shape[1]
    num_layers = len(params)

    flat = []
    for W, b in params:
        flat.append(W)
        flat.append(b)

    kernel = functools.partial(_mlp_kernel, num_layers=num_layers)
    out_shape = jax.ShapeDtypeStruct((B, Dout), jnp.float32)

    # Batch blocking only when it pays off (large, evenly-divisible batch).
    tb = batch_tile if (B > batch_tile and B % batch_tile == 0) else B
    num_blocks = B // tb

    if num_blocks == 1:
        # Grid-less fused kernel: all operands whole-array in VMEM, single
        # launch, no pipeline bookkeeping — ideal for small DQN batches.
        return pl.pallas_call(kernel, out_shape=out_shape)(x, *flat)

    # Batch-blocked path: x/out tiled along batch, weights resident in VMEM
    # for every grid step ("parallel" lets megacore/v7x shard the batch axis).
    wb_specs = []
    for W, b in params:
        wb_specs.append(pl.BlockSpec(W.shape, lambda i: (0, 0)))
        wb_specs.append(pl.BlockSpec(b.shape, lambda i: (0, 0)))

    return pl.pallas_call(
        kernel,
        out_shape=out_shape,
        grid=(num_blocks,),
        in_specs=[pl.BlockSpec((tb, Din), lambda i: (i, 0))] + wb_specs,
        out_specs=pl.BlockSpec((tb, Dout), lambda i: (i, 0)),
        compiler_params=pltpu.CompilerParams(
            dimension_semantics=("parallel",)
        ),
    )(x, *flat)


def init_params(key, input_dim, hidden, output_dim):
    """PyTorch-style nn.Linear init; W stored (in, out), b stored (1, out)."""
    dims = [input_dim] + list(hidden) + [output_dim]
    params = []
    for i in range(len(dims) - 1):
        key, kw, kb = jax.random.split(key, 3)
        fan_in = dims[i]
        bound = 1.0 / jnp.sqrt(fan_in)
        W = jax.random.uniform(kw, (dims[i], dims[i + 1]), jnp.float32, -bound, bound)
        b = jax.random.uniform(kb, (1, dims[i + 1]), jnp.float32, -bound, bound)
        params.append((W, b))
    return params


def _reference_forward(params, x):
    x = x.astype(jnp.float32)
    n = len(params)
    for idx, (W, b) in enumerate(params):
        x = x @ W + b
        if idx != n - 1:
            x = jnp.maximum(x, 0.0)
    return x


if __name__ == "__main__":
    key = jax.random.PRNGKey(0)
    key, kx, kx_big = jax.random.split(key, 3)

    input_dim = 16
    hidden = [32, 32]
    output_dim = 4

    params = init_params(key, input_dim, hidden, output_dim)

    # Small-batch path (grid-less fused kernel) — the typical DQN call shape.
    batch = 8
    x = jax.random.normal(kx, (batch, input_dim), jnp.float32)
    out = jax.block_until_ready(neural_network_forward(params, x))
    ref = _reference_forward(params, x)
    assert out.shape == (batch, output_dim)
    assert jnp.allclose(out, ref, atol=1e-4, rtol=1e-4)

    # Batch-blocked path (grid over batch, weights VMEM-resident, "parallel").
    big_batch = 1024
    x_big = jax.random.normal(kx_big, (big_batch, input_dim), jnp.float32)
    out_big = jax.block_until_ready(neural_network_forward(params, x_big))
    ref_big = _reference_forward(params, x_big)
    assert out_big.shape == (big_batch, output_dim)
    assert jnp.allclose(out_big, ref_big, atol=1e-4, rtol=1e-4)

    print("KERNEL_OK")
</pallas_src>

<mosaic_0001>
module attributes {stable_mosaic.version = 11 : i64} {
  func.func @_mlp_kernel(%arg0: memref<8x16xf32, #tpu.memory_space<vmem>>, %arg1: memref<16x32xf32, #tpu.memory_space<vmem>>, %arg2: memref<1x32xf32, #tpu.memory_space<vmem>>, %arg3: memref<32x32xf32, #tpu.memory_space<vmem>>, %arg4: memref<1x32xf32, #tpu.memory_space<vmem>>, %arg5: memref<32x4xf32, #tpu.memory_space<vmem>>, %arg6: memref<1x4xf32, #tpu.memory_space<vmem>>, %arg7: memref<8x4xf32, #tpu.memory_space<vmem>>) attributes {dimension_semantics = [], scalar_prefetch = 0 : i64, scratch_operands = 0 : i64, tpu.core_type = #tpu.core_type<tc>} {
    %c0 = arith.constant 0 : index
    %c0_0 = arith.constant 0 : index
    %0 = vector.load %arg0[%c0, %c0_0] : memref<8x16xf32, #tpu.memory_space<vmem>>, vector<8x16xf32>
    %c0_1 = arith.constant 0 : index
    %c0_2 = arith.constant 0 : index
    %1 = vector.load %arg1[%c0_1, %c0_2] : memref<16x32xf32, #tpu.memory_space<vmem>>, vector<16x32xf32>
    %c0_3 = arith.constant 0 : index
    %c0_4 = arith.constant 0 : index
    %2 = vector.load %arg2[%c0_3, %c0_4] : memref<1x32xf32, #tpu.memory_space<vmem>>, vector<1x32xf32>
    %cst = arith.constant dense<0.000000e+00> : vector<8x32xf32>
    %3 = tpu.matmul %0, %1, %cst {dimension_numbers = #tpu.dot_dimension_numbers<[1], [0], [0], [1], [0, 0, 1, 1], [], []>} : vector<8x16xf32>, vector<16x32xf32>, vector<8x32xf32> -> vector<8x32xf32>
    %4 = vector.broadcast %2 : vector<1x32xf32> to vector<8x32xf32>
    %5 = arith.addf %3, %4 : vector<8x32xf32>
    %cst_5 = arith.constant 0.000000e+00 : f32
    %6 = vector.broadcast %cst_5 : f32 to vector<8x32xf32>
    %7 = arith.maximumf %5, %6 : vector<8x32xf32>
    %c0_6 = arith.constant 0 : index
    %c0_7 = arith.constant 0 : index
    %8 = vector.load %arg3[%c0_6, %c0_7] : memref<32x32xf32, #tpu.memory_space<vmem>>, vector<32x32xf32>
    %c0_8 = arith.constant 0 : index
    %c0_9 = arith.constant 0 : index
    %9 = vector.load %arg4[%c0_8, %c0_9] : memref<1x32xf32, #tpu.memory_space<vmem>>, vector<1x32xf32>
    %cst_10 = arith.constant dense<0.000000e+00> : vector<8x32xf32>
    %10 = tpu.matmul %7, %8, %cst_10 {dimension_numbers = #tpu.dot_dimension_numbers<[1], [0], [0], [1], [0, 0, 1, 1], [], []>} : vector<8x32xf32>, vector<32x32xf32>, vector<8x32xf32> -> vector<8x32xf32>
    %11 = vector.broadcast %9 : vector<1x32xf32> to vector<8x32xf32>
    %12 = arith.addf %10, %11 : vector<8x32xf32>
    %cst_11 = arith.constant 0.000000e+00 : f32
    %13 = vector.broadcast %cst_11 : f32 to vector<8x32xf32>
    %14 = arith.maximumf %12, %13 : vector<8x32xf32>
    %c0_12 = arith.constant 0 : index
    %c0_13 = arith.constant 0 : index
    %15 = vector.load %arg5[%c0_12, %c0_13] : memref<32x4xf32, #tpu.memory_space<vmem>>, vector<32x4xf32>
    %c0_14 = arith.constant 0 : index
    %c0_15 = arith.constant 0 : index
    %16 = vector.load %arg6[%c0_14, %c0_15] : memref<1x4xf32, #tpu.memory_space<vmem>>, vector<1x4xf32>
    %cst_16 = arith.constant dense<0.000000e+00> : vector<8x4xf32>
    %17 = tpu.matmul %14, %15, %cst_16 {dimension_numbers = #tpu.dot_dimension_numbers<[1], [0], [0], [1], [0, 0, 1, 1], [], []>} : vector<8x32xf32>, vector<32x4xf32>, vector<8x4xf32> -> vector<8x4xf32>
    %18 = vector.broadcast %16 : vector<1x4xf32> to vector<8x4xf32>
    %19 = arith.addf %17, %18 : vector<8x4xf32>
    %c0_17 = arith.constant 0 : index
    %c0_18 = arith.constant 0 : index
    %20 = vector.load %arg7[%c0_17, %c0_18] : memref<8x4xf32, #tpu.memory_space<vmem>>, vector<8x4xf32>
    tpu.vector_store %arg7[%c0_17, %c0_18], %19 {strides = array<i32>} : memref<8x4xf32, #tpu.memory_space<vmem>>, vector<8x4xf32>,
    return
  }
}

</mosaic_0001>

<llo_original>
// kernel: tpu_custom_call.1
$region0: #{tpu_custom_call.1}
  #allocation0 [shape = 'u32[]', space=smem, size = 0x4, offset = 0x4, fixed_abs, tag = 'smem constant byte address 0x4 - core index']
  #allocation1 [shape = 'u32[144,128]{1,0:T(1,128)}', space=vmem, size = 0x12000, scoped, tag = 'internal scratch']
  %s0 = inlined_call_operand.vmem [shape: f32[8,16], index: 0, kind: input, shape index: {}]
  %s1 = inlined_call_operand.hbm [shape: f32[16,32], index: 1, kind: input, shape index: {}]
  %s2 = inlined_call_operand.vmem [shape: f32[1,32], index: 2, kind: input, shape index: {}]
  %s3 = inlined_call_operand.vmem [shape: f32[32,32], index: 3, kind: input, shape index: {}]
  %s4 = inlined_call_operand.vmem [shape: f32[1,32], index: 4, kind: input, shape index: {}]
  %s5 = inlined_call_operand.vmem [shape: f32[32,4], index: 5, kind: input, shape index: {}]
  %s6 = inlined_call_operand.vmem [shape: f32[1,4], index: 6, kind: input, shape index: {}]
  %s7 = inlined_call_operand.vmem [shape: f32[8,4], index: 7, kind: output, shape index: {}]
  %s8 = sld [smem:[#allocation0]]
  $region42: #{tpu_custom_call.1} parent=0
    _
  %s10 = ssub.s32 1, %s8
  %s11 = scalar_select 0, %s10, %s8
  $region1: #{tpu_custom_call.1} parent=0
    #allocation2 [shape = 'u8[8192]{0}', space=vmem, size = 0x2000, scoped, tag = 'input window, operand 1, single buffered']
    #allocation3 [shape = 's32[1]{0}', space=sflag, size = 0x4, scoped, tag = 'scoped memory for tpu_custom_call.1']
    %12 = vsyncpa [#allocation3], 0
    // Predicated region
    $region2: #{tpu_custom_call.1} parent=1 // pred_check
      _
    $region3: #{tpu_custom_call.1} parent=1 // pred_check_branch
      %14 = sbr.rel (0) target = $region5
    $region4: #{tpu_custom_call.1} parent=1 // pred_region
      _
    $region5: #{tpu_custom_call.1} parent=1 // pred_fallthru
      _
    // Predicated region
    $region6: #{tpu_custom_call.1} parent=1 // pred_check
      _
    $region7: #{tpu_custom_call.1} parent=1 // pred_check_branch
      %16 = sbr.rel (0) target = $region9
    $region8: #{tpu_custom_call.1} parent=1 // pred_region
      %s18 = ssub.s32 256, 256
      %19 = vsyncadd [#allocation3], %s18
      %s20 = sshll.u32 [#allocation2], 4
      %s21 = int_to_ptr.vmem [resolvable:$true] %s20
      %26 = dma.hbm_to_vmem [thread:$0]  %s1, 256, %s21, [#allocation3], 128, 128, 8
    $region9: #{tpu_custom_call.1} parent=1 // pred_fallthru
      _
    // Predicated region
    $region10: #{tpu_custom_call.1} parent=1 // pred_check
      _
    $region11: #{tpu_custom_call.1} parent=1 // pred_check_branch
      %28 = sbr.rel (0) target = $region13
    $region12: #{tpu_custom_call.1} parent=1 // pred_region
      _
    $region13: #{tpu_custom_call.1} parent=1 // pred_fallthru
      _
    // Predicated region
    $region14: #{tpu_custom_call.1} parent=1 // pred_check
      _
    $region15: #{tpu_custom_call.1} parent=1 // pred_check_branch
      %30 = sbr.rel (0) target = $region17
    $region16: #{tpu_custom_call.1} parent=1 // pred_region
      _
    $region17: #{tpu_custom_call.1} parent=1 // pred_fallthru
      _
    // Predicated region
    $region18: #{tpu_custom_call.1} parent=1 // pred_check
      _
    $region19: #{tpu_custom_call.1} parent=1 // pred_check_branch
      %32 = sbr.rel (0) target = $region21
    $region20: #{tpu_custom_call.1} parent=1 // pred_region
      _
    $region21: #{tpu_custom_call.1} parent=1 // pred_fallthru
      _
    // Predicated region
    $region22: #{tpu_custom_call.1} parent=1 // pred_check
      _
    $region23: #{tpu_custom_call.1} parent=1 // pred_check_branch
      %34 = sbr.rel (0) target = $region25
    $region24: #{tpu_custom_call.1} parent=1 // pred_region
      _
    $region25: #{tpu_custom_call.1} parent=1 // pred_fallthru
      _
    // Predicated region
    $region26: #{tpu_custom_call.1} parent=1 // pred_check
      _
    $region27: #{tpu_custom_call.1} parent=1 // pred_check_branch
      %36 = sbr.rel (0) target = $region29
    $region28: #{tpu_custom_call.1} parent=1 // pred_region
      _
    $region29: #{tpu_custom_call.1} parent=1 // pred_fallthru
      _
    // Predicated region
    $region30: #{tpu_custom_call.1} parent=1 // pred_check
      _
    $region31: #{tpu_custom_call.1} parent=1 // pred_check_branch
      %38 = sbr.rel (0) target = $region33
    $region32: #{tpu_custom_call.1} parent=1 // pred_region
      %39 = dma.done [#allocation3], 256
    $region33: #{tpu_custom_call.1} parent=1 // pred_fallthru
      _
    %v40 = vld [vmem:[%s0] sm:$0xff]
    %v41 = vld [vmem:[#allocation2] sm:$0xff]
    %v42 = vld [vmem:[#allocation2 + $0x8] sm:$0xff]
    %v43 = vld [vmem:[%s2] sm:$0x1]
    %v45 = vlaneseq
    %v46 = vshrl.u32 %v45, 7
    %v47 = vsub.s32 0, %v46
    %v48 = vrot.slane %v43, %v47
    %vm50 = vcmask 130048
    %v52 = vsel %vm50, %v40, 0
    %54 = vmatprep.subr.mxu0 0.0
    %55 = vmatpush1.msra.mxu0 %v41
    %56 = vmatprep.subr.mxu0 0.0
    %57 = vmatpush1.msra.mxu0 %v42
    %58 = vmatprep.subr.mxu0 0.0
    %59 = vmatpush1.msra.mxu0 0.0
    %60 = vmatprep.subr.mxu0 0.0
    %61 = vmatpush1.msra.mxu0 0.0
    %62 = vmatprep.subr.mxu0 0.0
    %63 = vmatpush1.msra.mxu0 0.0
    %64 = vmatprep.subr.mxu0 0.0
    %65 = vmatpush1.msra.mxu0 0.0
    %66 = vmatprep.subr.mxu0 0.0
    %67 = vmatpush1.msra.mxu0 0.0
    %68 = vmatprep.subr.mxu0 0.0
    %69 = vmatpush1.msra.mxu0 0.0
    %70 = vmatprep.subr.mxu0 0.0
    %71 = vmatpush1.msra.mxu0 0.0
    %72 = vmatprep.subr.mxu0 0.0
    %73 = vmatpush1.msra.mxu0 0.0
    %74 = vmatprep.subr.mxu0 0.0
    %75 = vmatpush1.msra.mxu0 0.0
    %76 = vmatprep.subr.mxu0 0.0
    %77 = vmatpush1.msra.mxu0 0.0
    %78 = vmatprep.subr.mxu0 0.0
    %79 = vmatpush1.msra.mxu0 0.0
    %80 = vmatprep.subr.mxu0 0.0
    %81 = vmatpush1.msra.mxu0 0.0
    %82 = vmatprep.subr.mxu0 0.0
    %83 = vmatpush1.msra.mxu0 0.0
    %84 = vmatprep.subr.mxu0 0.0
    %85 = vmatpush1.msra.mxu0 0.0
    %86 = vmatprep.subr.mxu0 0.0
    %87 = vmatpush1.msra.mxu0 0.0
    %88 = vmatprep.subr.mxu0 0.0
    %89 = vmatpush1.msra.mxu0 0.0
    %90 = vmatprep.subr.mxu0 0.0
    %91 = vmatpush1.msra.mxu0 0.0
    %92 = vmatprep.subr.mxu0 0.0
    %93 = vmatpush1.msra.mxu0 0.0
    %94 = vmatprep.subr.mxu0 0.0
    %95 = vmatpush1.msra.mxu0 0.0
    %96 = vmatprep.subr.mxu0 0.0
    %97 = vmatpush1.msra.mxu0 0.0
    %98 = vmatprep.subr.mxu0 0.0
    %99 = vmatpush1.msra.mxu0 0.0
    %100 = vmatprep.subr.mxu0 0.0
    %101 = vmatpush1.msra.mxu0 0.0
    %102 = vmatprep.subr.mxu0 0.0
    %103 = vmatpush1.msra.mxu0 0.0
    %104 = vmatprep.subr.mxu0 0.0
    %105 = vmatpush1.msra.mxu0 0.0
    %106 = vmatprep.subr.mxu0 0.0
    %107 = vmatpush1.msra.mxu0 0.0
    %108 = vmatprep.subr.mxu0 0.0
    %109 = vmatpush1.msra.mxu0 0.0
    %110 = vmatprep.subr.mxu0 0.0
    %111 = vmatpush1.msra.mxu0 0.0
    %112 = vmatprep.subr.mxu0 0.0
    %113 = vmatpush1.msra.mxu0 0.0
    %114 = vmatprep.subr.mxu0 0.0
    %115 = vmatpush1.msra.mxu0 0.0
    %116 = vmatprep.subr.mxu0 0.0
    %117 = vmatpush1.msra.mxu0 0.0
    %118 = vmatprep.mubr.f32.mxu0 0.0
    %119 = vmatmul.mubr.f32.gmra.mrb[0].mxu0 %v52
    %v120 = vpop.f32.mrb[0].mxu0
    %v121 = vadd.f32 %v48, %v120
    %v122 = vpop.f32.mrb[0].mxu0
    %123 = vdwg.mxu0
    %v124 = vmax.f32 %v121, 0.0
    %v125 = vld [vmem:[%s3] sm:$0xff]
    %v126 = vld [vmem:[%s3 + $0x8] sm:$0xff]
    %v127 = vld [vmem:[%s3 + $0x10] sm:$0xff]
    %v128 = vld [vmem:[%s3 + $0x18] sm:$0xff]
    %v129 = vld [vmem:[%s4] sm:$0x1]
    %v131 = vlaneseq
    %v132 = vshrl.u32 %v131, 7
    %v133 = vsub.s32 0, %v132
    %v134 = vrot.slane %v129, %v133
    %vm136 = vcmask 261120
    %v138 = vsel %vm136, %v124, 0
    %140 = vmatprep.subr.mxu0 0.0
    %141 = vmatpush1.msra.mxu0 %v125
    %142 = vmatprep.subr.mxu0 0.0
    %143 = vmatpush1.msra.mxu0 %v126
    %144 = vmatprep.subr.mxu0 0.0
    %145 = vmatpush1.msra.mxu0 %v127
    %146 = vmatprep.subr.mxu0 0.0
    %147 = vmatpush1.msra.mxu0 %v128
    %148 = vmatprep.subr.mxu0 0.0
    %149 = vmatpush1.msra.mxu0 0.0
    %150 = vmatprep.subr.mxu0 0.0
    %151 = vmatpush1.msra.mxu0 0.0
    %152 = vmatprep.subr.mxu0 0.0
    %153 = vmatpush1.msra.mxu0 0.0
    %154 = vmatprep.subr.mxu0 0.0
    %155 = vmatpush1.msra.mxu0 0.0
    %156 = vmatprep.subr.mxu0 0.0
    %157 = vmatpush1.msra.mxu0 0.0
    %158 = vmatprep.subr.mxu0 0.0
    %159 = vmatpush1.msra.mxu0 0.0
    %160 = vmatprep.subr.mxu0 0.0
    %161 = vmatpush1.msra.mxu0 0.0
    %162 = vmatprep.subr.mxu0 0.0
    %163 = vmatpush1.msra.mxu0 0.0
    %164 = vmatprep.subr.mxu0 0.0
    %165 = vmatpush1.msra.mxu0 0.0
    %166 = vmatprep.subr.mxu0 0.0
    %167 = vmatpush1.msra.mxu0 0.0
    %168 = vmatprep.subr.mxu0 0.0
    %169 = vmatpush1.msra.mxu0 0.0
    %170 = vmatprep.subr.mxu0 0.0
    %171 = vmatpush1.msra.mxu0 0.0
    %172 = vmatprep.subr.mxu0 0.0
    %173 = vmatpush1.msra.mxu0 0.0
    %174 = vmatprep.subr.mxu0 0.0
    %175 = vmatpush1.msra.mxu0 0.0
    %176 = vmatprep.subr.mxu0 0.0
    %177 = vmatpush1.msra.mxu0 0.0
    %178 = vmatprep.subr.mxu0 0.0
    %179 = vmatpush1.msra.mxu0 0.0
    %180 = vmatprep.subr.mxu0 0.0
    %181 = vmatpush1.msra.mxu0 0.0
    %182 = vmatprep.subr.mxu0 0.0
    %183 = vmatpush1.msra.mxu0 0.0
    %184 = vmatprep.subr.mxu0 0.0
    %185 = vmatpush1.msra.mxu0 0.0
    %186 = vmatprep.subr.mxu0 0.0
    %187 = vmatpush1.msra.mxu0 0.0
    %188 = vmatprep.subr.mxu0 0.0
    %189 = vmatpush1.msra.mxu0 0.0
    %190 = vmatprep.subr.mxu0 0.0
    %191 = vmatpush1.msra.mxu0 0.0
    %192 = vmatprep.subr.mxu0 0.0
    %193 = vmatpush1.msra.mxu0 0.0
    %194 = vmatprep.subr.mxu0 0.0
    %195 = vmatpush1.msra.mxu0 0.0
    %196 = vmatprep.subr.mxu0 0.0
    %197 = vmatpush1.msra.mxu0 0.0
    %198 = vmatprep.subr.mxu0 0.0
    %199 = vmatpush1.msra.mxu0 0.0
    %200 = vmatprep.subr.mxu0 0.0
    %201 = vmatpush1.msra.mxu0 0.0
    %202 = vmatprep.subr.mxu0 0.0
    %203 = vmatpush1.msra.mxu0 0.0
    %204 = vmatprep.mubr.f32.mxu0 0.0
    %205 = vmatmul.mubr.f32.gmra.mrb[0].mxu0 %v138
    %v206 = vpop.f32.mrb[0].mxu0
    %v207 = vadd.f32 %v134, %v206
    %v208 = vpop.f32.mrb[0].mxu0
    %209 = vdwg.mxu0
    %v210 = vmax.f32 %v207, 0.0
    %v211 = vld [vmem:[%s5] sm:$0xff]
    %v212 = vld [vmem:[%s5 + $0x8] sm:$0xff]
    %v213 = vld [vmem:[%s5 + $0x10] sm:$0xff]
    %v214 = vld [vmem:[%s5 + $0x18] sm:$0xff]
    %v215 = vld [vmem:[%s6] sm:$0x1]
    %v217 = vlaneseq
    %v218 = vshrl.u32 %v217, 7
    %v219 = vsub.s32 0, %v218
    %v220 = vrot.slane %v215, %v219
    %v223 = vsel %vm136, %v210, 0
    %225 = vmatprep.subr.mxu0 0.0
    %226 = vmatpush1.msra.mxu0 %v211
    %227 = vmatprep.subr.mxu0 0.0
    %228 = vmatpush1.msra.mxu0 %v212
    %229 = vmatprep.subr.mxu0 0.0
    %230 = vmatpush1.msra.mxu0 %v213
    %231 = vmatprep.subr.mxu0 0.0
    %232 = vmatpush1.msra.mxu0 %v214
    %233 = vmatprep.subr.mxu0 0.0
    %234 = vmatpush1.msra.mxu0 0.0
    %235 = vmatprep.subr.mxu0 0.0
    %236 = vmatpush1.msra.mxu0 0.0
    %237 = vmatprep.subr.mxu0 0.0
    %238 = vmatpush1.msra.mxu0 0.0
    %239 = vmatprep.subr.mxu0 0.0
    %240 = vmatpush1.msra.mxu0 0.0
    %241 = vmatprep.subr.mxu0 0.0
    %242 = vmatpush1.msra.mxu0 0.0
    %243 = vmatprep.subr.mxu0 0.0
    %244 = vmatpush1.msra.mxu0 0.0
    %245 = vmatprep.subr.mxu0 0.0
    %246 = vmatpush1.msra.mxu0 0.0
    %247 = vmatprep.subr.mxu0 0.0
    %248 = vmatpush1.msra.mxu0 0.0
    %249 = vmatprep.subr.mxu0 0.0
    %250 = vmatpush1.msra.mxu0 0.0
    %251 = vmatprep.subr.mxu0 0.0
    %252 = vmatpush1.msra.mxu0 0.0
    %253 = vmatprep.subr.mxu0 0.0
    %254 = vmatpush1.msra.mxu0 0.0
    %255 = vmatprep.subr.mxu0 0.0
    %256 = vmatpush1.msra.mxu0 0.0
    %257 = vmatprep.subr.mxu0 0.0
    %258 = vmatpush1.msra.mxu0 0.0
    %259 = vmatprep.subr.mxu0 0.0
    %260 = vmatpush1.msra.mxu0 0.0
    %261 = vmatprep.subr.mxu0 0.0
    %262 = vmatpush1.msra.mxu0 0.0
    %263 = vmatprep.subr.mxu0 0.0
    %264 = vmatpush1.msra.mxu0 0.0
    %265 = vmatprep.subr.mxu0 0.0
    %266 = vmatpush1.msra.mxu0 0.0
    %267 = vmatprep.subr.mxu0 0.0
    %268 = vmatpush1.msra.mxu0 0.0
    %269 = vmatprep.subr.mxu0 0.0
    %270 = vmatpush1.msra.mxu0 0.0
    %271 = vmatprep.subr.mxu0 0.0
    %272 = vmatpush1.msra.mxu0 0.0
    %273 = vmatprep.subr.mxu0 0.0
    %274 = vmatpush1.msra.mxu0 0.0
    %275 = vmatprep.subr.mxu0 0.0
    %276 = vmatpush1.msra.mxu0 0.0
    %277 = vmatprep.subr.mxu0 0.0
    %278 = vmatpush1.msra.mxu0 0.0
    %279 = vmatprep.subr.mxu0 0.0
    %280 = vmatpush1.msra.mxu0 0.0
    %281 = vmatprep.subr.mxu0 0.0
    %282 = vmatpush1.msra.mxu0 0.0
    %283 = vmatprep.subr.mxu0 0.0
    %284 = vmatpush1.msra.mxu0 0.0
    %285 = vmatprep.subr.mxu0 0.0
    %286 = vmatpush1.msra.mxu0 0.0
    %287 = vmatprep.subr.mxu0 0.0
    %288 = vmatpush1.msra.mxu0 0.0
    %289 = vmatprep.mubr.f32.mxu0 0.0
    %290 = vmatmul.mubr.f32.gmra.mrb[0].mxu0 %v223
    %v291 = vpop.f32.mrb[0].mxu0
    %v292 = vadd.f32 %v220, %v291
    %v293 = vpop.f32.mrb[0].mxu0
    %294 = vdwg.mxu0
    %vm295 = vcmask 31744
    %296 = vst.msk [vmem:[%s7] sm:$0xff] %vm295, %v292
    // Predicated region
    $region34: #{tpu_custom_call.1} parent=1 // pred_check
      _
    $region35: #{tpu_custom_call.1} parent=1 // pred_check_branch
      %298 = sbr.rel (0) target = $region37
    $region36: #{tpu_custom_call.1} parent=1 // pred_region
      _
    $region37: #{tpu_custom_call.1} parent=1 // pred_fallthru
      _
    // Predicated region
    $region38: #{tpu_custom_call.1} parent=1 // pred_check
      _
    $region39: #{tpu_custom_call.1} parent=1 // pred_check_branch
      %300 = sbr.rel (0) target = $region41
    $region40: #{tpu_custom_call.1} parent=1 // pred_region
      _
    $region41: #{tpu_custom_call.1} parent=1 // pred_fallthru
      _
    %301 = vsyncpa [#allocation3], 1

</llo_original>
